<compile_context>
chip_gen: v5e
topology: v5e:2x2
jax: 0.10.0
libtpu: 0.0.40
codegen_flags: <defaults>
</compile_context>

<pallas_src>
from functools import partial

import jax
import jax.numpy as jnp
from jax.experimental import pallas as pl
from jax.experimental.pallas import tpu as pltpu

LANES = 128  # padded lane width; fusion assumes input_dim <= 128 and E*H <= 128


# ----------------------------- kernel -----------------------------
def moe_kernel(xq_ref, w_ref, c_ref, out_ref, part_ref, *, num_experts, hidden, mu):
    E, H = num_experts, hidden
    P = LANES
    Bb = out_ref.shape[0]

    xq = xq_ref[...]                    # (Bb, 2P)
    x = xq[:, :P]                       # zero-padded backbone features
    q_cat = xq[:, P:]                   # task query tiled E times (zero-padded)

    w1p = w_ref[0:P, 0:P]               # (P, P)   concat per-expert W1 (zero rows >= D)
    w2p = w_ref[P:2 * P, 0:P]           # (P, P)   block-diagonal W2
    kvp = w_ref[2 * P:3 * P, :]         # (P, 2P)  [key blockdiag | value blockdiag]

    b1 = c_ref[0:1, :]                  # (1, P) lane-dense biases
    b2 = c_ref[1:2, :]
    sumh_seg = c_ref[8:8 + P, :]        # lanes [0,H): stacked I_H, lanes [H,H+E): seg
    segt = c_ref[8 + P:8 + P + E, :]    # (E, P) expert -> chunk expander

    cd = w_ref.dtype                    # MXU operand dtype (bf16 on v6e/v7x, or f32)

    # ---- 3 fused "big" dots: expert MLPs + key/value projections ----
    h1 = jnp.maximum(
        jnp.dot(x.astype(cd), w1p, preferred_element_type=jnp.float32) + b1, 0.0)
    h2 = jnp.maximum(
        jnp.dot(h1.astype(cd), w2p, preferred_element_type=jnp.float32) + b2, 0.0)
    kv = jnp.dot(h2.astype(cd), kvp, preferred_element_type=jnp.float32)   # (Bb, 2P)
    keys, vals = kv[:, :P], kv[:, P:]                                      # 128-aligned views

    # ---- selector dot (a): per-expert ||v||^2 and attention scores ----
    a_lhs = jnp.concatenate([vals * vals, keys * q_cat], axis=0)           # (2Bb, P)
    a_out = jnp.dot(a_lhs, sumh_seg, preferred_element_type=jnp.float32)   # (2Bb, P)
    nsq = a_out[:Bb, H:H + E]                                              # (Bb, E)
    scores = a_out[Bb:, H:H + E]                                           # (Bb, E)

    inv_nrm = jax.lax.rsqrt(jnp.maximum(nsq, 1e-24))   # == 1/max(||v||,1e-12)  (EUP)

    m = jnp.max(scores, axis=-1, keepdims=True)
    ex = jnp.exp(scores - m)
    denom = jnp.sum(ex, axis=-1, keepdims=True)
    weights = ex * pl.reciprocal(denom, approx=False)  # exact: result feeds log() below

    # ---- selector dot (b): expand (Bb,E) -> full E*H lanes ----
    b_lhs = jnp.concatenate([inv_nrm, weights], axis=0)                    # (2Bb, E)
    b_out = jnp.dot(b_lhs, segt, preferred_element_type=jnp.float32)       # (2Bb, P)
    inv_full, w_full = b_out[:Bb], b_out[Bb:]

    normed = vals * inv_full
    wv = w_full * vals

    # ---- selector dot (c): sum_e n_e, ||n_e||^2 and tower in one dot ----
    c_lhs = jnp.concatenate([normed, normed * normed, wv], axis=0)         # (3Bb, P)
    c_out = jnp.dot(c_lhs, sumh_seg, preferred_element_type=jnp.float32)   # (3Bb, P)
    s = c_out[:Bb, :H]                 # sum_e n_e        (Bb, H)
    unit = c_out[Bb:2 * Bb, H:H + E]   # ||n_e||^2        (Bb, E)
    tower = c_out[2 * Bb:, :H]         # tower input      (Bb, H)

    # per-block partial sum for the batch-global pairwise cosine term:
    #   sum_{i<j} n_i.n_j = 0.5 * (||sum_e n_e||^2 - sum_e ||n_e||^2)   (per row)
    diff = jnp.sum(s * s, keepdims=True) - jnp.sum(unit, keepdims=True)    # (1, 1)
    row = jax.lax.broadcasted_iota(jnp.int32, part_ref.shape, 0)
    part_ref[...] = jnp.where(row == 0, diff, 0.0)

    # per-row log part of the regularizer (similarity term is added by the wrapper)
    log_sum = jnp.sum(jnp.log(weights + 1e-6), axis=-1, keepdims=True)     # (Bb, 1)
    logterm = -(1.0 / E) * mu * log_sum

    # lane-dense packed store: tower in lanes [0,H), log-term broadcast in [H,P)
    packed = jnp.concatenate(
        [tower, jnp.broadcast_to(logterm, (Bb, P - H))], axis=-1)
    out_ref[...] = packed.astype(out_ref.dtype)


# ------------------------- param transform -------------------------
def fuse_moe_params(w1, b1, w2, b2, km, vm, task_queries, *, compute_dtype=jnp.float32):
    """One-time transform of the torch parameters into three fused operands:
       * wslab (3P, 2P) in compute dtype: [W1 concat ; W2 blockdiag ; key|value blockdiag]
       * cslab (8+P+8, P) f32: biases, [sumh|seg] selector, segt expander
       * tqp   (T, P) f32: task queries pre-tiled E times (lane-dense)."""
    E, D, H = w1.shape
    EH = E * H
    P = LANES
    assert D <= P and EH <= P, "padded fusion assumes input_dim<=128 and E*H<=128"
    # TODO(synk): if E*H or D grows past 128, switch W2/KM/VM back to a per-expert
    # grid axis instead of dense (EH,EH) blocks (VMEM pressure, esp. v7x 64 MiB).

    def blockdiag(m):                                       # (E,H,H) -> (P,P)
        out = jnp.zeros((P, P), jnp.float32)
        for e in range(E):
            out = out.at[e * H:(e + 1) * H, e * H:(e + 1) * H].set(m[e])
        return out

    w1p = jnp.zeros((P, P), jnp.float32).at[:D, :EH].set(
        jnp.concatenate([w1[e] for e in range(E)], axis=1))
    w2p = blockdiag(w2)
    kvp = jnp.concatenate([blockdiag(km), blockdiag(vm)], axis=1)   # (P, 2P)

    wslab = jnp.zeros((3 * P, 2 * P), jnp.float32)
    wslab = wslab.at[0:P, 0:P].set(w1p)
    wslab = wslab.at[P:2 * P, 0:P].set(w2p)
    wslab = wslab.at[2 * P:3 * P, :].set(kvp)
    wslab = wslab.astype(compute_dtype)

    sumh = jnp.tile(jnp.eye(H, dtype=jnp.float32), (E, 1))          # (EH, H)
    seg = jnp.repeat(jnp.eye(E, dtype=jnp.float32), H, axis=0)      # (EH, E)

    cslab = jnp.zeros((8 + P + 8, P), jnp.float32)
    cslab = cslab.at[0, :EH].set(b1.reshape(EH))
    cslab = cslab.at[1, :EH].set(b2.reshape(EH))
    cslab = cslab.at[8:8 + EH, :H].set(sumh)
    cslab = cslab.at[8:8 + EH, H:H + E].set(seg)
    cslab = cslab.at[8 + P:8 + P + E, :EH].set(seg.T)

    T = task_queries.shape[0]
    tqp = jnp.zeros((T, P), jnp.float32).at[:, :EH].set(
        jnp.tile(task_queries, (1, E)))
    return wslab, cslab, tqp


# ----------------------------- wrapper -----------------------------
def moe_forward(x, fused_params, task, *, num_experts, hidden, mu=0.01, block_b=None):
    """Returns (tower_input (B,H), reg_loss_term (B,)) matching the torch module."""
    wslab, cslab, tqp = fused_params
    E, H = num_experts, hidden
    P = LANES
    B, D = x.shape

    if block_b is None:
        # ~10 live (block_b, 128/256) f32 temps per block: keep well inside the
        # 32 MiB default scoped VMEM (and v7x's 64 MiB physical VMEM).
        block_b = min(B, 1024)
    assert B % block_b == 0 and block_b % 8 == 0, "batch must tile into 8-row blocks"
    nb = B // block_b

    # glue (XLA): gather+tile task query, pack [x_pad | q_cat] into one lane-dense ref
    xq = jnp.zeros((B, 2 * P), jnp.float32)
    xq = xq.at[:, :D].set(x)
    xq = xq.at[:, P:].set(tqp[task])

    kernel = partial(moe_kernel, num_experts=E, hidden=H, mu=mu)

    # advisory cost estimate (tiny, overhead-dominated call)
    flops = 2 * B * (4 * P * P) + 2 * B * (5 * P * P + 2 * E * P)
    transcendentals = B * (3 * E + 1)
    bytes_accessed = int(xq.size * 4 + wslab.size * wslab.dtype.itemsize
                         + cslab.size * 4 + B * P * 4 + nb * 8 * P * 4)

    out, partials = pl.pallas_call(
        kernel,
        grid=(nb,),
        in_specs=[
            pl.BlockSpec((block_b, 2 * P), lambda i: (i, 0)),
            pl.BlockSpec(wslab.shape, lambda i: (0, 0)),   # constant index: fetched once
            pl.BlockSpec(cslab.shape, lambda i: (0, 0)),   # constant index: fetched once
        ],
        out_specs=(
            pl.BlockSpec((block_b, P), lambda i: (i, 0)),
            pl.BlockSpec((8, P), lambda i: (i, 0)),
        ),
        out_shape=(
            jax.ShapeDtypeStruct((B, P), jnp.float32),
            jax.ShapeDtypeStruct((nb * 8, P), jnp.float32),
        ),
        compiler_params=pltpu.CompilerParams(dimension_semantics=("parallel",)),
        cost_estimate=pl.CostEstimate(flops=flops,
                                      transcendentals=transcendentals,
                                      bytes_accessed=bytes_accessed),
    )(xq, wslab, cslab)

    tower = out[:, :H]
    n_pairs = E * (E - 1) // 2
    similarity = 0.5 * jnp.sum(partials[:, 0]) / float(n_pairs * B)
    reg = out[:, H] + mu * jnp.abs(similarity)
    return tower, reg


# ----------------- pure-JAX reference (for validation) -----------------
def moe_ref(x, params, task, mu=0.01):
    w1, b1, w2, b2, km, vm, tq = params
    E = w1.shape[0]
    outs = []
    for e in range(E):
        h1 = jnp.maximum(x @ w1[e] + b1[e, 0], 0.0)
        h2 = jnp.maximum(h1 @ w2[e] + b2[e, 0], 0.0)
        outs.append(h2)
    eo = jnp.stack(outs, axis=1)                                  # (B,E,H)
    keys = jnp.einsum('kli,lij->klj', eo, km)
    vals = jnp.einsum('kli,lij->klj', eo, vm)
    nrm = vals / jnp.maximum(jnp.linalg.norm(vals, axis=-1, keepdims=True), 1e-12)
    pairs = []
    for i in range(E):
        for j in range(i + 1, E):
            pairs.append(jnp.sum(nrm[:, i] * nrm[:, j], axis=-1))
    similarity = jnp.mean(jnp.stack(pairs))
    scores = jnp.einsum('kni,ki->kn', keys, tq[task])
    w = jax.nn.softmax(scores, axis=-1)
    tower = jnp.einsum('kn,kni->ki', w, vals)
    reg = -(1.0 / E) * mu * jnp.sum(jnp.log(w + 1e-6), axis=-1) + mu * jnp.abs(similarity)
    return tower, reg


if __name__ == "__main__":
    B, D, H, E, T = 8, 32, 32, 3, 4   # batch, input_dim, hidden_size, num_experts, num_tasks
    mu = 0.01

    key = jax.random.PRNGKey(0)
    ks = jax.random.split(key, 9)
    x = jax.random.normal(ks[0], (B, D), jnp.float32)
    task = jax.random.randint(ks[1], (B,), 0, T)

    # deterministic synthetic parameters (shapes from MoELayer.__init__)
    w1 = jax.random.normal(ks[2], (E, D, H), jnp.float32) * 0.1   # Linear(input_dim, hidden)
    b1 = jax.random.normal(ks[3], (E, 1, H), jnp.float32) * 0.1
    w2 = jax.random.normal(ks[4], (E, H, H), jnp.float32) * 0.1   # Linear(hidden, hidden)
    b2 = jax.random.normal(ks[5], (E, 1, H), jnp.float32) * 0.1
    km = jax.random.normal(ks[6], (E, H, H), jnp.float32)         # key_matricies
    vm = jax.random.normal(ks[7], (E, H, H), jnp.float32)         # value_matricies
    tq = jax.random.normal(ks[8], (T, H), jnp.float32)            # task_queries

    tower_ref, reg_ref = moe_ref(x, (w1, b1, w2, b2, km, vm, tq), task, mu=mu)

    # --- f32 MXU-operand path: tight check against the pure-JAX reference ---
    fused_f32 = fuse_moe_params(w1, b1, w2, b2, km, vm, tq, compute_dtype=jnp.float32)
    tower, reg = moe_forward(x, fused_f32, task, num_experts=E, hidden=H, mu=mu)
    jax.block_until_ready((tower, reg))
    assert jnp.allclose(tower, tower_ref, atol=5e-3, rtol=5e-3), "tower mismatch (f32)"
    assert jnp.allclose(reg, reg_ref, atol=5e-4, rtol=5e-3), "reg loss mismatch (f32)"

    # --- bf16 MXU-operand path (native single-pass dtype on v6e/v7x): sanity check ---
    fused_bf16 = fuse_moe_params(w1, b1, w2, b2, km, vm, tq, compute_dtype=jnp.bfloat16)
    tower_b, reg_b = moe_forward(x, fused_bf16, task, num_experts=E, hidden=H, mu=mu)
    jax.block_until_ready((tower_b, reg_b))
    terr = jnp.linalg.norm(tower_b - tower_ref) / jnp.linalg.norm(tower_ref)
    rerr = jnp.max(jnp.abs(reg_b - reg_ref))
    assert float(terr) < 0.2 and float(rerr) < 1e-2, "bf16 path mismatch"

    print("KERNEL_OK")
</pallas_src>

<mosaic_0001>
module attributes {stable_mosaic.version = 11 : i64} {
  func.func @moe_kernel(%arg0: i32, %arg1: memref<8x256xf32, #tpu.memory_space<vmem>>, %arg2: memref<384x256xf32, #tpu.memory_space<vmem>>, %arg3: memref<144x128xf32, #tpu.memory_space<vmem>>, %arg4: memref<8x128xf32, #tpu.memory_space<vmem>>, %arg5: memref<8x128xf32, #tpu.memory_space<vmem>>) attributes {dimension_semantics = [#tpu.dimension_semantics<parallel>], iteration_bounds = array<i64: 1>, scalar_prefetch = 0 : i64, scratch_operands = 0 : i64, tpu.core_type = #tpu.core_type<tc>, window_params = [{transform_indices = @transform_0, window_bounds = array<i64: 8, 256>}, {pipeline_mode = #tpu.pipeline_mode<synchronous>, transform_indices = @transform_1, window_bounds = array<i64: 384, 256>}, {pipeline_mode = #tpu.pipeline_mode<synchronous>, transform_indices = @transform_2, window_bounds = array<i64: 144, 128>}, {transform_indices = @transform_3, window_bounds = array<i64: 8, 128>}, {transform_indices = @transform_4, window_bounds = array<i64: 8, 128>}]} {
    %c0 = arith.constant 0 : index
    %c0_0 = arith.constant 0 : index
    %0 = vector.load %arg1[%c0, %c0_0] : memref<8x256xf32, #tpu.memory_space<vmem>>, vector<8x256xf32>
    %1 = vector.extract_strided_slice %0 {offsets = [0, 0], sizes = [8, 128], strides = [1, 1]} : vector<8x256xf32> to vector<8x128xf32>
    %2 = vector.extract_strided_slice %0 {offsets = [0, 128], sizes = [8, 128], strides = [1, 1]} : vector<8x256xf32> to vector<8x128xf32>
    %c0_1 = arith.constant 0 : index
    %c0_2 = arith.constant 0 : index
    %3 = vector.load %arg2[%c0_1, %c0_2] : memref<384x256xf32, #tpu.memory_space<vmem>>, vector<128x128xf32>
    %c128 = arith.constant 128 : index
    %c0_3 = arith.constant 0 : index
    %4 = vector.load %arg2[%c128, %c0_3] : memref<384x256xf32, #tpu.memory_space<vmem>>, vector<128x128xf32>
    %c256 = arith.constant 256 : index
    %c0_4 = arith.constant 0 : index
    %5 = vector.load %arg2[%c256, %c0_4] : memref<384x256xf32, #tpu.memory_space<vmem>>, vector<128x256xf32>
    %c0_5 = arith.constant 0 : index
    %c0_6 = arith.constant 0 : index
    %6 = vector.load %arg3[%c0_5, %c0_6] : memref<144x128xf32, #tpu.memory_space<vmem>>, vector<1x128xf32>
    %c1 = arith.constant 1 : index
    %c0_7 = arith.constant 0 : index
    %7 = vector.load %arg3[%c1, %c0_7] : memref<144x128xf32, #tpu.memory_space<vmem>>, vector<1x128xf32>
    %c8 = arith.constant 8 : index
    %c0_8 = arith.constant 0 : index
    %8 = vector.load %arg3[%c8, %c0_8] : memref<144x128xf32, #tpu.memory_space<vmem>>, vector<128x128xf32>
    %c136 = arith.constant 136 : index
    %c0_9 = arith.constant 0 : index
    %9 = vector.load %arg3[%c136, %c0_9] : memref<144x128xf32, #tpu.memory_space<vmem>>, vector<3x128xf32>
    %cst = arith.constant dense<0.000000e+00> : vector<8x128xf32>
    %10 = tpu.matmul %1, %3, %cst {dimension_numbers = #tpu.dot_dimension_numbers<[1], [0], [0], [1], [0, 0, 1, 1], [], []>} : vector<8x128xf32>, vector<128x128xf32>, vector<8x128xf32> -> vector<8x128xf32>
    %11 = vector.broadcast %6 : vector<1x128xf32> to vector<8x128xf32>
    %12 = arith.addf %10, %11 : vector<8x128xf32>
    %cst_10 = arith.constant 0.000000e+00 : f32
    %13 = vector.broadcast %cst_10 : f32 to vector<8x128xf32>
    %14 = arith.maximumf %12, %13 : vector<8x128xf32>
    %cst_11 = arith.constant dense<0.000000e+00> : vector<8x128xf32>
    %15 = tpu.matmul %14, %4, %cst_11 {dimension_numbers = #tpu.dot_dimension_numbers<[1], [0], [0], [1], [0, 0, 1, 1], [], []>} : vector<8x128xf32>, vector<128x128xf32>, vector<8x128xf32> -> vector<8x128xf32>
    %16 = vector.broadcast %7 : vector<1x128xf32> to vector<8x128xf32>
    %17 = arith.addf %15, %16 : vector<8x128xf32>
    %cst_12 = arith.constant 0.000000e+00 : f32
    %18 = vector.broadcast %cst_12 : f32 to vector<8x128xf32>
    %19 = arith.maximumf %17, %18 : vector<8x128xf32>
    %cst_13 = arith.constant dense<0.000000e+00> : vector<8x256xf32>
    %20 = tpu.matmul %19, %5, %cst_13 {dimension_numbers = #tpu.dot_dimension_numbers<[1], [0], [0], [1], [0, 0, 1, 1], [], []>} : vector<8x128xf32>, vector<128x256xf32>, vector<8x256xf32> -> vector<8x256xf32>
    %21 = vector.extract_strided_slice %20 {offsets = [0, 0], sizes = [8, 128], strides = [1, 1]} : vector<8x256xf32> to vector<8x128xf32>
    %22 = vector.extract_strided_slice %20 {offsets = [0, 128], sizes = [8, 128], strides = [1, 1]} : vector<8x256xf32> to vector<8x128xf32>
    %23 = arith.mulf %22, %22 : vector<8x128xf32>
    %24 = arith.mulf %21, %2 : vector<8x128xf32>
    %25 = tpu.concatenate %23, %24 in 0 : vector<8x128xf32>, vector<8x128xf32> -> vector<16x128xf32>
    %cst_14 = arith.constant dense<0.000000e+00> : vector<16x128xf32>
    %26 = tpu.matmul %25, %8, %cst_14 {dimension_numbers = #tpu.dot_dimension_numbers<[1], [0], [0], [1], [0, 0, 1, 1], [], []>} : vector<16x128xf32>, vector<128x128xf32>, vector<16x128xf32> -> vector<16x128xf32>
    %27 = vector.extract_strided_slice %26 {offsets = [0, 32], sizes = [8, 3], strides = [1, 1]} : vector<16x128xf32> to vector<8x3xf32>
    %28 = vector.extract_strided_slice %26 {offsets = [8, 32], sizes = [8, 3], strides = [1, 1]} : vector<16x128xf32> to vector<8x3xf32>
    %cst_15 = arith.constant 1.000000e-24 : f32
    %29 = vector.broadcast %cst_15 : f32 to vector<8x3xf32>
    %30 = arith.maximumf %27, %29 : vector<8x3xf32>
    %31 = math.rsqrt %30 : vector<8x3xf32>
    %cst_16 = arith.constant dense<0xFF800000> : vector<8xf32>
    %32 = vector.multi_reduction <maximumf>, %28, %cst_16 [1] : vector<8x3xf32> to vector<8xf32>
    %33 = vector.shape_cast %32 : vector<8xf32> to vector<8x1xf32>
    %34 = vector.broadcast %33 : vector<8x1xf32> to vector<8x3xf32>
    %35 = arith.subf %28, %34 : vector<8x3xf32>
    %36 = math.exp %35 : vector<8x3xf32>
    %cst_17 = arith.constant dense<0.000000e+00> : vector<8xf32>
    %37 = vector.multi_reduction <add>, %36, %cst_17 [1] : vector<8x3xf32> to vector<8xf32>
    %38 = vector.shape_cast %37 : vector<8xf32> to vector<8x1xf32>
    %39 = tpu.reciprocal %38 : vector<8x1xf32> -> vector<8x1xf32>
    %40 = vector.broadcast %39 : vector<8x1xf32> to vector<8x3xf32>
    %41 = arith.mulf %36, %40 : vector<8x3xf32>
    %42 = tpu.concatenate %31, %41 in 0 : vector<8x3xf32>, vector<8x3xf32> -> vector<16x3xf32>
    %cst_18 = arith.constant dense<0.000000e+00> : vector<16x128xf32>
    %43 = tpu.matmul %42, %9, %cst_18 {dimension_numbers = #tpu.dot_dimension_numbers<[1], [0], [0], [1], [0, 0, 1, 1], [], []>} : vector<16x3xf32>, vector<3x128xf32>, vector<16x128xf32> -> vector<16x128xf32>
    %44 = vector.extract_strided_slice %43 {offsets = [0, 0], sizes = [8, 128], strides = [1, 1]} : vector<16x128xf32> to vector<8x128xf32>
    %45 = vector.extract_strided_slice %43 {offsets = [8, 0], sizes = [8, 128], strides = [1, 1]} : vector<16x128xf32> to vector<8x128xf32>
    %46 = arith.mulf %22, %44 : vector<8x128xf32>
    %47 = arith.mulf %45, %22 : vector<8x128xf32>
    %48 = arith.mulf %46, %46 : vector<8x128xf32>
    %49 = tpu.concatenate %46, %48, %47 in 0 : vector<8x128xf32>, vector<8x128xf32>, vector<8x128xf32> -> vector<24x128xf32>
    %cst_19 = arith.constant dense<0.000000e+00> : vector<24x128xf32>
    %50 = tpu.matmul %49, %8, %cst_19 {dimension_numbers = #tpu.dot_dimension_numbers<[1], [0], [0], [1], [0, 0, 1, 1], [], []>} : vector<24x128xf32>, vector<128x128xf32>, vector<24x128xf32> -> vector<24x128xf32>
    %51 = vector.extract_strided_slice %50 {offsets = [0, 0], sizes = [8, 32], strides = [1, 1]} : vector<24x128xf32> to vector<8x32xf32>
    %52 = vector.extract_strided_slice %50 {offsets = [8, 32], sizes = [8, 3], strides = [1, 1]} : vector<24x128xf32> to vector<8x3xf32>
    %53 = vector.extract_strided_slice %50 {offsets = [16, 0], sizes = [8, 32], strides = [1, 1]} : vector<24x128xf32> to vector<8x32xf32>
    %54 = arith.mulf %51, %51 : vector<8x32xf32>
    %55 = vector.shape_cast %54 : vector<8x32xf32> to vector<1x8x32xf32>
    %cst_20 = arith.constant dense<0.000000e+00> : vector<1xf32>
    %56 = vector.multi_reduction <add>, %55, %cst_20 [1, 2] : vector<1x8x32xf32> to vector<1xf32>
    %57 = vector.shape_cast %56 : vector<1xf32> to vector<1x1x1xf32>
    %58 = vector.extract %57[0, 0, 0] : f32 from vector<1x1x1xf32>
    %59 = vector.broadcast %58 : f32 to vector<1x1xf32>
    %60 = vector.shape_cast %52 : vector<8x3xf32> to vector<1x8x3xf32>
    %cst_21 = arith.constant dense<0.000000e+00> : vector<1xf32>
    %61 = vector.multi_reduction <add>, %60, %cst_21 [1, 2] : vector<1x8x3xf32> to vector<1xf32>
    %62 = vector.shape_cast %61 : vector<1xf32> to vector<1x1x1xf32>
    %63 = vector.extract %62[0, 0, 0] : f32 from vector<1x1x1xf32>
    %64 = vector.broadcast %63 : f32 to vector<1x1xf32>
    %65 = arith.subf %59, %64 : vector<1x1xf32>
    %66 = tpu.iota {dimensions = array<i32: 0>} : vector<8x128xi32>
    %c0_i32 = arith.constant 0 : i32
    %67 = vector.broadcast %c0_i32 : i32 to vector<8x128xi32>
    %68 = arith.cmpi eq, %66, %67 : vector<8x128xi32>
    %cst_22 = arith.constant 0.000000e+00 : f32
    %69 = vector.shape_cast %65 : vector<1x1xf32> to vector<1x1xf32>
    %70 = vector.broadcast %69 : vector<1x1xf32> to vector<8x128xf32>
    %71 = vector.broadcast %cst_22 : f32 to vector<8x128xf32>
    %72 = arith.select %68, %70, %71 : vector<8x128xi1>, vector<8x128xf32>
    %c0_23 = arith.constant 0 : index
    %c0_24 = arith.constant 0 : index
    %73 = vector.load %arg5[%c0_23, %c0_24] : memref<8x128xf32, #tpu.memory_space<vmem>>, vector<8x128xf32>
    tpu.vector_store %arg5[%c0_23, %c0_24], %72 {strides = array<i32>} : memref<8x128xf32, #tpu.memory_space<vmem>>, vector<8x128xf32>,
    %cst_25 = arith.constant 9.99999997E-7 : f32
    %74 = vector.broadcast %cst_25 : f32 to vector<8x3xf32>
    %75 = arith.addf %41, %74 : vector<8x3xf32>
    %76 = math.log %75 : vector<8x3xf32>
    %cst_26 = arith.constant dense<0.000000e+00> : vector<8xf32>
    %77 = vector.multi_reduction <add>, %76, %cst_26 [1] : vector<8x3xf32> to vector<8xf32>
    %78 = vector.shape_cast %77 : vector<8xf32> to vector<8x1xf32>
    %cst_27 = arith.constant -0.00333333341 : f32
    %79 = vector.broadcast %cst_27 : f32 to vector<8x1xf32>
    %80 = arith.mulf %79, %78 : vector<8x1xf32>
    %81 = vector.shape_cast %80 : vector<8x1xf32> to vector<8x1xf32>
    %82 = vector.broadcast %81 : vector<8x1xf32> to vector<8x96xf32>
    %83 = tpu.concatenate %53, %82 in 1 : vector<8x32xf32>, vector<8x96xf32> -> vector<8x128xf32>
    %c0_28 = arith.constant 0 : index
    %c0_29 = arith.constant 0 : index
    %84 = vector.load %arg4[%c0_28, %c0_29] : memref<8x128xf32, #tpu.memory_space<vmem>>, vector<8x128xf32>
    tpu.vector_store %arg4[%c0_28, %c0_29], %83 {strides = array<i32>} : memref<8x128xf32, #tpu.memory_space<vmem>>, vector<8x128xf32>,
    return
  }
  func.func @transform_0(%arg0: i32) -> (i32, i32) {
    %c0_i32 = arith.constant 0 : i32
    %c0_i32_0 = arith.constant 0 : i32
    return %arg0, %c0_i32 : i32, i32
  }
  func.func @transform_1(%arg0: i32) -> (i32, i32) {
    %c0_i32 = arith.constant 0 : i32
    %c0_i32_0 = arith.constant 0 : i32
    %c0_i32_1 = arith.constant 0 : i32
    return %c0_i32, %c0_i32_0 : i32, i32
  }
  func.func @transform_2(%arg0: i32) -> (i32, i32) {
    %c0_i32 = arith.constant 0 : i32
    %c0_i32_0 = arith.constant 0 : i32
    %c0_i32_1 = arith.constant 0 : i32
    return %c0_i32, %c0_i32_0 : i32, i32
  }
  func.func @transform_3(%arg0: i32) -> (i32, i32) {
    %c0_i32 = arith.constant 0 : i32
    %c0_i32_0 = arith.constant 0 : i32
    return %arg0, %c0_i32 : i32, i32
  }
  func.func @transform_4(%arg0: i32) -> (i32, i32) {
    %c0_i32 = arith.constant 0 : i32
    %c0_i32_0 = arith.constant 0 : i32
    return %arg0, %c0_i32 : i32, i32
  }
}

</mosaic_0001>

<llo_original>
// kernel: tpu_custom_call.1
$region0: #{tpu_custom_call.1}
  #allocation0 [shape = 'u32[]', space=smem, size = 0x4, offset = 0x4, fixed_abs, tag = 'smem constant byte address 0x4 - core index']
  #allocation1 [shape = 'u32[72,128]{1,0:T(1,128)}', space=vmem, size = 0x9000, scoped, tag = 'internal scratch']
  %s0 = inlined_call_operand.hbm [shape: f32[8,256], index: 0, kind: input, shape index: {}]
  %s1 = inlined_call_operand.hbm [shape: f32[384,256], index: 1, kind: input, shape index: {}]
  %s2 = inlined_call_operand.hbm [shape: f32[144,128], index: 2, kind: input, shape index: {}]
  %s3 = inlined_call_operand.hbm [shape: f32[8,128], index: 3, kind: output, shape index: {0}]
  %s4 = inlined_call_operand.hbm [shape: f32[8,128], index: 4, kind: output, shape index: {1}]
  %5 = xla_tuple %s3, %s4
  %s6 = sld [smem:[#allocation0]]
  $region42: #{tpu_custom_call.1} parent=0
    _
  %s8 = ssub.s32 1, %s6
  %s9 = scalar_select 0, %s8, %s6
  $region1: #{tpu_custom_call.1} parent=0
    #allocation2 [shape = 'u8[8192]{0}', space=vmem, size = 0x2000, scoped, tag = 'input window, operand 0, single buffered']
    #allocation3 [shape = 's32[1]{0}', space=sflag, size = 0x4, scoped, tag = 'scoped memory for tpu_custom_call.1']
    #allocation4 [shape = 's32[1]{0}', space=sflag, size = 0x4, scoped, tag = 'scoped memory for tpu_custom_call.1']
    #allocation5 [shape = 'u8[393216]{0}', space=vmem, size = 0x60000, scoped, tag = 'input window, operand 1, single buffered']
    #allocation6 [shape = 's32[1]{0}', space=sflag, size = 0x4, scoped, tag = 'scoped memory for tpu_custom_call.1']
    #allocation7 [shape = 'u8[73728]{0}', space=vmem, size = 0x12000, scoped, tag = 'input window, operand 2, single buffered']
    #allocation8 [shape = 'u8[4096]{0}', space=vmem, size = 0x1000, scoped, tag = 'output window, operand 0, single buffered']
    #allocation9 [shape = 'u8[4096]{0}', space=vmem, size = 0x1000, scoped, tag = 'output window, operand 1, single buffered']
    #allocation10 [shape = 's32[1]{0}', space=sflag, size = 0x4, scoped, tag = 'scoped memory for tpu_custom_call.1']
    %10 = vsyncpa [#allocation3], 0
    %11 = vsyncpa [#allocation6], 0
    %12 = vsyncpa [#allocation4], 0
    %13 = vsyncpa [#allocation10], 0
    // Predicated region
    $region2: #{tpu_custom_call.1} parent=1 // pred_check
      _
    $region3: #{tpu_custom_call.1} parent=1 // pred_check_branch
      %15 = sbr.rel (0) target = $region5
    $region4: #{tpu_custom_call.1} parent=1 // pred_region
      %17 = vsyncadd [#allocation3], 0
      %s19 = sshll.u32 %s0, 4
      %s20 = int_to_ptr.hbm [resolvable:$true] %s19
      %s21 = sshll.u32 [#allocation2], 4
      %s22 = int_to_ptr.vmem [resolvable:$true] %s21
      %24 = dma.hbm_to_vmem [thread:$0]  %s20, 256, %s22, [#allocation3]
    $region5: #{tpu_custom_call.1} parent=1 // pred_fallthru
      _
    // Predicated region
    $region6: #{tpu_custom_call.1} parent=1 // pred_check
      _
    $region7: #{tpu_custom_call.1} parent=1 // pred_check_branch
      %26 = sbr.rel (0) target = $region9
    $region8: #{tpu_custom_call.1} parent=1 // pred_region
      %28 = vsyncadd [#allocation6], 0
      %s29 = sshll.u32 %s1, 4
      %s30 = int_to_ptr.hbm [resolvable:$true] %s29
      %s31 = sshll.u32 [#allocation5], 4
      %s32 = int_to_ptr.vmem [resolvable:$true] %s31
      %37 = dma.hbm_to_vmem [thread:$0]  %s30, 12288, %s32, [#allocation6], 256, 256, 16
    $region9: #{tpu_custom_call.1} parent=1 // pred_fallthru
      _
    // Predicated region
    $region10: #{tpu_custom_call.1} parent=1 // pred_check
      _
    $region11: #{tpu_custom_call.1} parent=1 // pred_check_branch
      %39 = sbr.rel (0) target = $region13
    $region12: #{tpu_custom_call.1} parent=1 // pred_region
      %41 = vsyncadd [#allocation6], 0
      %s42 = sshll.u32 %s2, 4
      %s43 = int_to_ptr.hbm [resolvable:$true] %s42
      %s44 = sshll.u32 [#allocation7], 4
      %s45 = int_to_ptr.vmem [resolvable:$true] %s44
      %50 = dma.hbm_to_vmem [thread:$0]  %s43, 2304, %s45, [#allocation6], 128, 128, 8
    $region13: #{tpu_custom_call.1} parent=1 // pred_fallthru
      _
    // Predicated region
    $region14: #{tpu_custom_call.1} parent=1 // pred_check
      _
    $region15: #{tpu_custom_call.1} parent=1 // pred_check_branch
      %52 = sbr.rel (0) target = $region17
    $region16: #{tpu_custom_call.1} parent=1 // pred_region
      %54 = dma.done [#allocation3], 256
    $region17: #{tpu_custom_call.1} parent=1 // pred_fallthru
      _
    // Predicated region
    $region18: #{tpu_custom_call.1} parent=1 // pred_check
      _
    $region19: #{tpu_custom_call.1} parent=1 // pred_check_branch
      %56 = sbr.rel (0) target = $region21
    $region20: #{tpu_custom_call.1} parent=1 // pred_region
      %58 = dma.done [#allocation6], 12288
    $region21: #{tpu_custom_call.1} parent=1 // pred_fallthru
      _
    // Predicated region
    $region22: #{tpu_custom_call.1} parent=1 // pred_check
      _
    $region23: #{tpu_custom_call.1} parent=1 // pred_check_branch
      %60 = sbr.rel (0) target = $region25
    $region24: #{tpu_custom_call.1} parent=1 // pred_region
      %62 = dma.done [#allocation6], 2304
    $region25: #{tpu_custom_call.1} parent=1 // pred_fallthru
      _
    %v63 = vld [vmem:[#allocation2] sm:$0xff]
    %v64 = vld [vmem:[#allocation2 + $0x8] sm:$0xff]
    %v65 = vld [vmem:[#allocation5] sm:$0xff]
    %v66 = vld [vmem:[#allocation5 + $0x10] sm:$0xff]
    %v67 = vld [vmem:[#allocation5 + $0x20] sm:$0xff]
    %v68 = vld [vmem:[#allocation5 + $0x30] sm:$0xff]
    %v69 = vld [vmem:[#allocation5 + $0x40] sm:$0xff]
    %v70 = vld [vmem:[#allocation5 + $0x50] sm:$0xff]
    %v71 = vld [vmem:[#allocation5 + $0x60] sm:$0xff]
    %v72 = vld [vmem:[#allocation5 + $0x70] sm:$0xff]
    %v73 = vld [vmem:[#allocation5 + $0x80] sm:$0xff]
    %v74 = vld [vmem:[#allocation5 + $0x90] sm:$0xff]
    %v75 = vld [vmem:[#allocation5 + $0xa0] sm:$0xff]
    %v76 = vld [vmem:[#allocation5 + $0xb0] sm:$0xff]
    %v77 = vld [vmem:[#allocation5 + $0xc0] sm:$0xff]
    %v78 = vld [vmem:[#allocation5 + $0xd0] sm:$0xff]
    %v79 = vld [vmem:[#allocation5 + $0xe0] sm:$0xff]
    %v80 = vld [vmem:[#allocation5 + $0xf0] sm:$0xff]
    %v81 = vld [vmem:[#allocation5 + $0x100] sm:$0xff]
    %v82 = vld [vmem:[#allocation5 + $0x110] sm:$0xff]
    %v83 = vld [vmem:[#allocation5 + $0x120] sm:$0xff]
    %v84 = vld [vmem:[#allocation5 + $0x130] sm:$0xff]
    %v85 = vld [vmem:[#allocation5 + $0x140] sm:$0xff]
    %v86 = vld [vmem:[#allocation5 + $0x150] sm:$0xff]
    %v87 = vld [vmem:[#allocation5 + $0x160] sm:$0xff]
    %v88 = vld [vmem:[#allocation5 + $0x170] sm:$0xff]
    %v89 = vld [vmem:[#allocation5 + $0x180] sm:$0xff]
    %v90 = vld [vmem:[#allocation5 + $0x190] sm:$0xff]
    %v91 = vld [vmem:[#allocation5 + $0x1a0] sm:$0xff]
    %v92 = vld [vmem:[#allocation5 + $0x1b0] sm:$0xff]
    %v93 = vld [vmem:[#allocation5 + $0x1c0] sm:$0xff]
    %v94 = vld [vmem:[#allocation5 + $0x1d0] sm:$0xff]
    %v95 = vld [vmem:[#allocation5 + $0x1e0] sm:$0xff]
    %v96 = vld [vmem:[#allocation5 + $0x1f0] sm:$0xff]
    %v97 = vld [vmem:[#allocation5 + $0x200] sm:$0xff]
    %v98 = vld [vmem:[#allocation5 + $0x208] sm:$0xff]
    %v99 = vld [vmem:[#allocation5 + $0x210] sm:$0xff]
    %v100 = vld [vmem:[#allocation5 + $0x218] sm:$0xff]
    %v101 = vld [vmem:[#allocation5 + $0x220] sm:$0xff]
    %v102 = vld [vmem:[#allocation5 + $0x228] sm:$0xff]
    %v103 = vld [vmem:[#allocation5 + $0x230] sm:$0xff]
    %v104 = vld [vmem:[#allocation5 + $0x238] sm:$0xff]
    %v105 = vld [vmem:[#allocation5 + $0x240] sm:$0xff]
    %v106 = vld [vmem:[#allocation5 + $0x248] sm:$0xff]
    %v107 = vld [vmem:[#allocation5 + $0x250] sm:$0xff]
    %v108 = vld [vmem:[#allocation5 + $0x258] sm:$0xff]
    %v109 = vld [vmem:[#allocation5 + $0x260] sm:$0xff]
    %v110 = vld [vmem:[#allocation5 + $0x268] sm:$0xff]
    %v111 = vld [vmem:[#allocation5 + $0x270] sm:$0xff]
    %v112 = vld [vmem:[#allocation5 + $0x278] sm:$0xff]
    %v113 = vld [vmem:[#allocation5 + $0x280] sm:$0xff]
    %v114 = vld [vmem:[#allocation5 + $0x288] sm:$0xff]
    %v115 = vld [vmem:[#allocation5 + $0x290] sm:$0xff]
    %v116 = vld [vmem:[#allocation5 + $0x298] sm:$0xff]
    %v117 = vld [vmem:[#allocation5 + $0x2a0] sm:$0xff]
    %v118 = vld [vmem:[#allocation5 + $0x2a8] sm:$0xff]
    %v119 = vld [vmem:[#allocation5 + $0x2b0] sm:$0xff]
    %v120 = vld [vmem:[#allocation5 + $0x2b8] sm:$0xff]
    %v121 = vld [vmem:[#allocation5 + $0x2c0] sm:$0xff]
    %v122 = vld [vmem:[#allocation5 + $0x2c8] sm:$0xff]
    %v123 = vld [vmem:[#allocation5 + $0x2d0] sm:$0xff]
    %v124 = vld [vmem:[#allocation5 + $0x2d8] sm:$0xff]
    %v125 = vld [vmem:[#allocation5 + $0x2e0] sm:$0xff]
    %v126 = vld [vmem:[#allocation5 + $0x2e8] sm:$0xff]
    %v127 = vld [vmem:[#allocation5 + $0x2f0] sm:$0xff]
    %v128 = vld [vmem:[#allocation5 + $0x2f8] sm:$0xff]
    %v129 = vld [vmem:[#allocation7] sm:$0x1]
    %v130 = vld [vmem:[#allocation7 + $0x1] sm:$0x1]
    %v131 = vld [vmem:[#allocation7 + $0x8] sm:$0xff]
    %v132 = vld [vmem:[#allocation7 + $0x10] sm:$0xff]
    %v133 = vld [vmem:[#allocation7 + $0x18] sm:$0xff]
    %v134 = vld [vmem:[#allocation7 + $0x20] sm:$0xff]
    %v135 = vld [vmem:[#allocation7 + $0x28] sm:$0xff]
    %v136 = vld [vmem:[#allocation7 + $0x30] sm:$0xff]
    %v137 = vld [vmem:[#allocation7 + $0x38] sm:$0xff]
    %v138 = vld [vmem:[#allocation7 + $0x40] sm:$0xff]
    %v139 = vld [vmem:[#allocation7 + $0x48] sm:$0xff]
    %v140 = vld [vmem:[#allocation7 + $0x50] sm:$0xff]
    %v141 = vld [vmem:[#allocation7 + $0x58] sm:$0xff]
    %v142 = vld [vmem:[#allocation7 + $0x60] sm:$0xff]
    %v143 = vld [vmem:[#allocation7 + $0x68] sm:$0xff]
    %v144 = vld [vmem:[#allocation7 + $0x70] sm:$0xff]
    %v145 = vld [vmem:[#allocation7 + $0x78] sm:$0xff]
    %v146 = vld [vmem:[#allocation7 + $0x80] sm:$0xff]
    %v147 = vld [vmem:[#allocation7 + $0x88] sm:$0x7]
    %v148 = vperm.slane %v129, 0
    %149 = vmatpush.msra.mxu0 %v80
    %150 = vmatpush.msra.mxu0 %v79
    %151 = vmatpush.msra.mxu0 %v78
    %152 = vmatpush.msra.mxu0 %v77
    %153 = vmatpush.msra.mxu0 %v76
    %154 = vmatpush.msra.mxu0 %v75
    %155 = vmatpush.msra.mxu0 %v74
    %156 = vmatpush.msra.mxu0 %v73
    %157 = vmatpush.msra.mxu0 %v72
    %158 = vmatpush.msra.mxu0 %v71
    %159 = vmatpush.msra.mxu0 %v70
    %160 = vmatpush.msra.mxu0 %v69
    %161 = vmatpush.msra.mxu0 %v68
    %162 = vmatpush.msra.mxu0 %v67
    %163 = vmatpush.msra.mxu0 %v66
    %164 = vmatpush.msra.mxu0 %v65
    %165 = vmatmul.f32.gmra.mxu0 %v63
    %v166 = vpop.f32.mrf.mxu0
    %v167 = vadd.f32 %v148, %v166
    %168 = vdwg.mxu0
    %v169 = vmax.f32 %v167, 0.0
    %v170 = vperm.slane %v130, 0
    %171 = vmatpush.msra.mxu0 %v96
    %172 = vmatpush.msra.mxu0 %v95
    %173 = vmatpush.msra.mxu0 %v94
    %174 = vmatpush.msra.mxu0 %v93
    %175 = vmatpush.msra.mxu0 %v92
    %176 = vmatpush.msra.mxu0 %v91
    %177 = vmatpush.msra.mxu0 %v90
    %178 = vmatpush.msra.mxu0 %v89
    %179 = vmatpush.msra.mxu0 %v88
    %180 = vmatpush.msra.mxu0 %v87
    %181 = vmatpush.msra.mxu0 %v86
    %182 = vmatpush.msra.mxu0 %v85
    %183 = vmatpush.msra.mxu0 %v84
    %184 = vmatpush.msra.mxu0 %v83
    %185 = vmatpush.msra.mxu0 %v82
    %186 = vmatpush.msra.mxu0 %v81
    %187 = vmatmul.f32.gmra.mxu0 %v169
    %v188 = vpop.f32.mrf.mxu0
    %v189 = vadd.f32 %v170, %v188
    %190 = vdwg.mxu0
    %v191 = vmax.f32 %v189, 0.0
    %192 = vmatpush.msra.mxu0 %v127
    %193 = vmatpush.msra.mxu0 %v125
    %194 = vmatpush.msra.mxu0 %v123
    %195 = vmatpush.msra.mxu0 %v121
    %196 = vmatpush.msra.mxu0 %v119
    %197 = vmatpush.msra.mxu0 %v117
    %198 = vmatpush.msra.mxu0 %v115
    %199 = vmatpush.msra.mxu0 %v113
    %200 = vmatpush.msra.mxu0 %v111
    %201 = vmatpush.msra.mxu0 %v109
    %202 = vmatpush.msra.mxu0 %v107
    %203 = vmatpush.msra.mxu0 %v105
    %204 = vmatpush.msra.mxu0 %v103
    %205 = vmatpush.msra.mxu0 %v101
    %206 = vmatpush.msra.mxu0 %v99
    %207 = vmatpush.msra.mxu0 %v97
    %208 = vmatmul.f32.gmra.mxu0 %v191
    %v209 = vpop.f32.mrf.mxu0
    %v210 = vadd.f32 0.0, %v209
    %211 = vdwg.mxu0
    %212 = vmatpush.msra.mxu0 %v128
    %213 = vmatpush.msra.mxu0 %v126
    %214 = vmatpush.msra.mxu0 %v124
    %215 = vmatpush.msra.mxu0 %v122
    %216 = vmatpush.msra.mxu0 %v120
    %217 = vmatpush.msra.mxu0 %v118
    %218 = vmatpush.msra.mxu0 %v116
    %219 = vmatpush.msra.mxu0 %v114
    %220 = vmatpush.msra.mxu0 %v112
    %221 = vmatpush.msra.mxu0 %v110
    %222 = vmatpush.msra.mxu0 %v108
    %223 = vmatpush.msra.mxu0 %v106
    %224 = vmatpush.msra.mxu0 %v104
    %225 = vmatpush.msra.mxu0 %v102
    %226 = vmatpush.msra.mxu0 %v100
    %227 = vmatpush.msra.mxu0 %v98
    %228 = vmatmul.f32.gmra.mxu0 %v191
    %v229 = vpop.f32.mrf.mxu0
    %v230 = vadd.f32 0.0, %v229
    %231 = vdwg.mxu0
    %v232 = vmul.f32 %v230, %v230
    %v233 = vmul.f32 %v210, %v64
    %234 = vmatpush.msra.mxu0 %v146
    %235 = vmatpush.msra.mxu0 %v145
    %236 = vmatpush.msra.mxu0 %v144
    %237 = vmatpush.msra.mxu0 %v143
    %238 = vmatpush.msra.mxu0 %v142
    %239 = vmatpush.msra.mxu0 %v141
    %240 = vmatpush.msra.mxu0 %v140
    %241 = vmatpush.msra.mxu0 %v139
    %242 = vmatpush.msra.mxu0 %v138
    %243 = vmatpush.msra.mxu0 %v137
    %244 = vmatpush.msra.mxu0 %v136
    %245 = vmatpush.msra.mxu0 %v135
    %246 = vmatpush.msra.mxu0 %v134
    %247 = vmatpush.msra.mxu0 %v133
    %248 = vmatpush.msra.mxu0 %v132
    %249 = vmatpush.msra.mxu0 %v131
    %250 = vmatmul.f32.gmra.mxu0 %v232
    %v251 = vpop.f32.mrf.mxu0
    %v252 = vadd.f32 0.0, %v251
    %253 = vmatmul.f32.gmra.mxu0 %v233
    %v254 = vpop.f32.mrf.mxu0
    %v255 = vadd.f32 0.0, %v254
    %256 = vdwg.mxu0
    %v257 = vmax.f32 %v252, 1e-24
    %v258 = vrsqrt.pop %v257
    %v259 = vmul.f32 %v258, %v257
    %v260 = vmul.f32 %v259, %v258
    %v261 = vmul.f32 0.5, %v260
    %v262 = vsub.f32 1.5, %v261
    %v263 = vmul.f32 %v258, %v262
    %vm264 = vweird.f32 %v257
    %vm265 = vweird.f32 %v258
    %vm266 = vmor %vm264, %vm265
    %v267 = vsel %vm266, %v258, %v263
    %vm268 = vcmask 285952
    %v269 = vsel %vm268, %v255, -inf
    %270 = vmax.xlane.f32.xlu0 %v269
    %v271 = vpop.xlane.xlu0 %270
    %v272 = vsub.f32 %v255, %v271
    %v273 = vmul.f32 %v272, 1.442695
    %v274 = vpow.pop %v273
    %276 = vrot.lane.b32.xlu0 %v274, 96
    %v277 = vpop.permute.xlu0 %276
    %vm279 = vcmask 23552
    %v280 = vsel %vm279, %v277, 0.0
    %281 = vadd.xlane.f32.xlu0 %v280
    %v282 = vpop.xlane.xlu0 %281
    %v283 = vrcp.pop %v282
    %v284 = vmul.f32 %v282, %v283
    %v285 = vsub.f32 1.0, %v284
    %v286 = vmul.f32 %v283, %v285
    %v287 = vadd.f32 %v283, %v286
    %vm288 = vweird.f32 %v282
    %vm289 = vweird.f32 %v283
    %vm290 = vmor %vm288, %vm289
    %v291 = vsel %vm290, %v283, %v287
    %v292 = vand.u32 2147483647, %v282
    %vm293 = vcmp.eq.f32.partialorder %v292, 8.507059e+37
    %v294 = vand.u32 %v282, 2147483648
    %v295 = vor.u32 1.1754944e-38, %v294
    %v296 = vsel %vm293, %v295, %v291
    %v297 = vmul.f32 %v274, %v296
    %300 = vrot.lane.b32.xlu0 %v267, 96
    %v301 = vpop.permute.xlu0 %300
    %302 = vrot.lane.b32.xlu0 %v297, 96
    %v303 = vpop.permute.xlu0 %302
    %v304 = vsel %vm279, %v301, 0
    %v306 = vsel %vm279, %v303, 0
    %vm308 = vcmask 1042432
    %v310 = vsel %vm308, %v147, 0
    %312 = vmatpush.msra.mxu0 0.0
    %313 = vmatpush.msra.mxu0 0.0
    %314 = vmatpush.msra.mxu0 0.0
    %315 = vmatpush.msra.mxu0 0.0
    %316 = vmatpush.msra.mxu0 0.0
    %317 = vmatpush.msra.mxu0 0.0
    %318 = vmatpush.msra.mxu0 0.0
    %319 = vmatpush.msra.mxu0 0.0
    %320 = vmatpush.msra.mxu0 0.0
    %321 = vmatpush.msra.mxu0 0.0
    %322 = vmatpush.msra.mxu0 0.0
    %323 = vmatpush.msra.mxu0 0.0
    %324 = vmatpush.msra.mxu0 0.0
    %325 = vmatpush.msra.mxu0 0.0
    %326 = vmatpush.msra.mxu0 0.0
    %327 = vmatpush.msra.mxu0 %v310
    %328 = vmatmul.f32.gmra.mxu0 %v304
    %v329 = vpop.f32.mrf.mxu0
    %v330 = vadd.f32 0.0, %v329
    %331 = vmatmul.f32.gmra.mxu0 %v306
    %v332 = vpop.f32.mrf.mxu0
    %v333 = vadd.f32 0.0, %v332
    %334 = vdwg.mxu0
    %v335 = vmul.f32 %v230, %v330
    %v336 = vmul.f32 %v333, %v230
    %v337 = vmul.f32 %v335, %v335
    %338 = vmatpush.msra.mxu0 %v146
    %339 = vmatpush.msra.mxu0 %v145
    %340 = vmatpush.msra.mxu0 %v144
    %341 = vmatpush.msra.mxu0 %v143
    %342 = vmatpush.msra.mxu0 %v142
    %343 = vmatpush.msra.mxu0 %v141
    %344 = vmatpush.msra.mxu0 %v140
    %345 = vmatpush.msra.mxu0 %v139
    %346 = vmatpush.msra.mxu0 %v138
    %347 = vmatpush.msra.mxu0 %v137
    %348 = vmatpush.msra.mxu0 %v136
    %349 = vmatpush.msra.mxu0 %v135
    %350 = vmatpush.msra.mxu0 %v134
    %351 = vmatpush.msra.mxu0 %v133
    %352 = vmatpush.msra.mxu0 %v132
    %353 = vmatpush.msra.mxu0 %v131
    %354 = vmatmul.f32.gmra.mxu0 %v335
    %v355 = vpop.f32.mrf.mxu0
    %v356 = vadd.f32 0.0, %v355
    %357 = vmatmul.f32.gmra.mxu0 %v337
    %v358 = vpop.f32.mrf.mxu0
    %v359 = vadd.f32 0.0, %v358
    %360 = vmatmul.f32.gmra.mxu0 %v336
    %v361 = vpop.f32.mrf.mxu0
    %v362 = vadd.f32 0.0, %v361
    %363 = vdwg.mxu0
    %v364 = vmul.f32 %v356, %v356
    %vm365 = vcmask 261120
    %v366 = vsel %vm365, %v364, 0.0
    %367 = vadd.xlane.f32.xlu0 %v366
    %v368 = vpop.xlane.xlu0 %367
    %v369 = vrot.slane %v368, 4
    %v370 = vadd.f32 %v368, %v369
    %v371 = vrot.slane %v370, 2
    %v372 = vadd.f32 %v370, %v371
    %v373 = vrot.slane %v372, 1
    %v374 = vadd.f32 %v372, %v373
    %s375 = vtos %v374
    %v376 = vstv %s375
    %378 = vrot.lane.b32.xlu0 %v359, 96
    %v379 = vpop.permute.xlu0 %378
    %v381 = vsel %vm279, %v379, 0.0
    %382 = vadd.xlane.f32.xlu0 %v381
    %v383 = vpop.xlane.xlu0 %382
    %v384 = vrot.slane %v383, 4
    %v385 = vadd.f32 %v383, %v384
    %v386 = vrot.slane %v385, 2
    %v387 = vadd.f32 %v385, %v386
    %v388 = vrot.slane %v387, 1
    %v389 = vadd.f32 %v387, %v388
    %s390 = vtos %v389
    %v391 = vstv %s390
    %v392 = vsub.f32 %v376, %v391
    %v393 = vlaneseq
    %v394 = vshrl.u32 %v393, 7
    %vm395 = vcmp.eq.s32.totalorder %v394, 0
    %v396 = vsel %vm395, %v392, 0.0
    %397 = vst [vmem:[#allocation9] sm:$0xff] %v396
    %v398 = vadd.f32 %v297, 1e-06
    %v399 = vlog2.pop %v398
    %v400 = vmul.f32 %v399, 0.6931472
    %402 = vrot.lane.b32.xlu0 %v400, 96
    %v403 = vpop.permute.xlu0 %402
    %v405 = vsel %vm279, %v403, 0.0
    %406 = vadd.xlane.f32.xlu0 %v405
    %v407 = vpop.xlane.xlu0 %406
    %v408 = vmul.f32 %v407, -0.0033333334
    %v409 = vsel %vm365, %v362, %v408
    %410 = vst [vmem:[#allocation8] sm:$0xff] %v409
    // Predicated region
    $region26: #{tpu_custom_call.1} parent=1 // pred_check
      _
    $region27: #{tpu_custom_call.1} parent=1 // pred_check_branch
      %412 = sbr.rel (0) target = $region29
    $region28: #{tpu_custom_call.1} parent=1 // pred_region
      %414 = vsyncadd [#allocation4], 0
      %s416 = sshll.u32 [#allocation8], 4
      %s417 = int_to_ptr.vmem [resolvable:$true] %s416
      %s418 = sshll.u32 %s3, 4
      %s419 = int_to_ptr.hbm [resolvable:$true] %s418
      %421 = dma.vmem_to_hbm [thread:$0]  %s417, 128, %s419, [#allocation4]
    $region29: #{tpu_custom_call.1} parent=1 // pred_fallthru
      _
    // Predicated region
    $region30: #{tpu_custom_call.1} parent=1 // pred_check
      _
    $region31: #{tpu_custom_call.1} parent=1 // pred_check_branch
      %423 = sbr.rel (0) target = $region33
    $region32: #{tpu_custom_call.1} parent=1 // pred_region
      %425 = vsyncadd [#allocation10], 0
      %s427 = sshll.u32 [#allocation9], 4
      %s428 = int_to_ptr.vmem [resolvable:$true] %s427
      %s429 = sshll.u32 %s4, 4
      %s430 = int_to_ptr.hbm [resolvable:$true] %s429
      %432 = dma.vmem_to_hbm [thread:$0]  %s428, 128, %s430, [#allocation10]
    $region33: #{tpu_custom_call.1} parent=1 // pred_fallthru
      _
    // Predicated region
    $region34: #{tpu_custom_call.1} parent=1 // pred_check
      _
    $region35: #{tpu_custom_call.1} parent=1 // pred_check_branch
      %434 = sbr.rel (0) target = $region37
    $region36: #{tpu_custom_call.1} parent=1 // pred_region
      %436 = dma.done [#allocation4], 128
    $region37: #{tpu_custom_call.1} parent=1 // pred_fallthru
      _
    // Predicated region
    $region38: #{tpu_custom_call.1} parent=1 // pred_check
      _
    $region39: #{tpu_custom_call.1} parent=1 // pred_check_branch
      %438 = sbr.rel (0) target = $region41
    $region40: #{tpu_custom_call.1} parent=1 // pred_region
      %440 = dma.done [#allocation10], 128
    $region41: #{tpu_custom_call.1} parent=1 // pred_fallthru
      _
    %441 = vsyncpa [#allocation3], 1
    %442 = vsyncpa [#allocation6], 1
    %443 = vsyncpa [#allocation4], 1
    %444 = vsyncpa [#allocation10], 1

</llo_original>
